<compile_context>
chip_gen: v6e
topology: v6e:2x2x1
jax: 0.10.0
libtpu: 0.0.40
codegen_flags: <defaults>
</compile_context>

<pallas_src>
import math
from functools import partial

import jax
import jax.numpy as jnp
from jax.experimental import pallas as pl
from jax.experimental.pallas import tpu as pltpu


def _flatten_dma_copy_kernel(x_ref, o_ref, sem, *, row_chunks):
    """Chunked HBM->HBM identity copy of the (n, d) flattened view.

    `row_chunks` is a static tuple of (row_start, row_count) slabs; each slab
    is a fully contiguous byte range of the row-major array, so every DMA is a
    single contiguous descriptor.  All copies are issued before any wait so up
    to len(row_chunks) transfers are in flight.
    """
    copies = []
    for idx, (start, size) in enumerate(row_chunks):
        cp = pltpu.make_async_copy(
            x_ref.at[pl.ds(start, size), :],
            o_ref.at[pl.ds(start, size), :],
            sem.at[idx],
        )
        cp.start()
        copies.append(cp)
    for cp in copies:
        cp.wait()


def _row_chunks(n, d, itemsize, *, max_outstanding=4, min_chunk_bytes=4 << 20):
    """Split rows into <= max_outstanding contiguous slabs of >= min_chunk_bytes."""
    total_bytes = n * d * itemsize
    n_chunks = max(1, min(max_outstanding, n, total_bytes // min_chunk_bytes))
    base, rem = divmod(n, n_chunks)
    chunks, start = [], 0
    for i in range(n_chunks):
        size = base + (1 if i < rem else 0)
        if size > 0:
            chunks.append((start, size))
            start += size
    return tuple(chunks)


def flatten_layer(x, *, materialize=False):
    """Pallas equivalent of FlattenLayer.forward: (N, ...) -> (N, prod(...)).

    Default (materialize=False): the reshape itself -- free, metadata only,
    exactly matching torch .view(N, -1) on a contiguous tensor.  This is the
    recommended production path.

    materialize=True: additionally force a fresh output buffer via a chunked
    HBM->HBM DMA copy Pallas kernel (no VMEM round trip).
    """
    n = x.shape[0]
    d = math.prod(x.shape[1:])

    # Row-major collapse of all non-batch dims: free in XLA.
    x2d = jnp.reshape(x, (n, d))
    if not materialize:
        return x2d

    chunks = _row_chunks(n, d, jnp.dtype(x.dtype).itemsize)
    kernel = partial(_flatten_dma_copy_kernel, row_chunks=chunks)

    return pl.pallas_call(
        kernel,
        out_shape=jax.ShapeDtypeStruct((n, d), x.dtype),
        # Leave both arrays where they are (HBM); the kernel moves bytes with
        # explicit DMA, so no BlockSpec tiling / VMEM buffering is involved.
        in_specs=[pl.BlockSpec(memory_space=pl.ANY)],
        out_specs=pl.BlockSpec(memory_space=pl.ANY),
        scratch_shapes=[pltpu.SemaphoreType.DMA((len(chunks),))],
    )(x2d)


if __name__ == "__main__":
    key = jax.random.PRNGKey(0)
    # Small NCHW input consistent with the module's forward: batch=2, C=4, H=W=16.
    x = jax.random.normal(key, (2, 4, 16, 16), dtype=jnp.float32)

    y_fast = flatten_layer(x)                    # recommended: free reshape
    y_kern = flatten_layer(x, materialize=True)  # Pallas HBM->HBM DMA copy
    y_fast, y_kern = jax.block_until_ready((y_fast, y_kern))

    # Reference check against plain-JAX flatten (== torch .view(N, -1)).
    y_ref = jnp.reshape(x, (x.shape[0], -1))
    assert y_fast.shape == (2, 4 * 16 * 16), y_fast.shape
    assert y_kern.shape == (2, 4 * 16 * 16), y_kern.shape
    assert y_kern.dtype == x.dtype
    assert bool(jnp.array_equal(y_fast, y_ref))
    assert bool(jnp.array_equal(y_kern, y_ref))

    print("KERNEL_OK")
</pallas_src>

<mosaic_0001>
module attributes {stable_mosaic.version = 11 : i64} {
  func.func @_flatten_dma_copy_kernel(%arg0: memref<2x1024xf32, #tpu.memory_space<any>>, %arg1: memref<2x1024xf32, #tpu.memory_space<any>>, %arg2: memref<1x!tpu.dma_semaphore, #tpu.memory_space<semaphore_mem>>) attributes {dimension_semantics = [], scalar_prefetch = 0 : i64, scratch_operands = 1 : i64, tpu.core_type = #tpu.core_type<tc>} {
    %c0_i32 = arith.constant 0 : i32
    %c0_i32_0 = arith.constant 0 : i32
    %c0_i32_1 = arith.constant 0 : i32
    %0 = tpu.memref_slice %arg0[%c0_i32_0, %c0_i32_1] : memref<2x1024xf32, #tpu.memory_space<any>> -> memref<2x1024xf32, #tpu.memory_space<any>>
    %c0_i32_2 = arith.constant 0 : i32
    %c0_i32_3 = arith.constant 0 : i32
    %1 = tpu.memref_slice %arg1[%c0_i32_2, %c0_i32_3] : memref<2x1024xf32, #tpu.memory_space<any>> -> memref<2x1024xf32, #tpu.memory_space<any>>
    %2 = tpu.memref_slice %arg2[%c0_i32] : memref<1x!tpu.dma_semaphore, #tpu.memory_space<semaphore_mem>> -> memref<1x!tpu.dma_semaphore, #tpu.memory_space<semaphore_mem>>
    %3 = tpu.memref_squeeze %2 : memref<1x!tpu.dma_semaphore, #tpu.memory_space<semaphore_mem>> -> memref<!tpu.dma_semaphore, #tpu.memory_space<semaphore_mem>>
    tpu.enqueue_dma source(%0 : memref<2x1024xf32, #tpu.memory_space<any>>) target(%1 : memref<2x1024xf32, #tpu.memory_space<any>>) target_semaphore(%3 : memref<!tpu.dma_semaphore, #tpu.memory_space<semaphore_mem>>)
    %c0_i32_4 = arith.constant 0 : i32
    %c0_i32_5 = arith.constant 0 : i32
    %c0_i32_6 = arith.constant 0 : i32
    %4 = tpu.memref_slice %arg0[%c0_i32_5, %c0_i32_6] : memref<2x1024xf32, #tpu.memory_space<any>> -> memref<2x1024xf32, #tpu.memory_space<any>>
    %c0_i32_7 = arith.constant 0 : i32
    %c0_i32_8 = arith.constant 0 : i32
    %5 = tpu.memref_slice %arg1[%c0_i32_7, %c0_i32_8] : memref<2x1024xf32, #tpu.memory_space<any>> -> memref<2x1024xf32, #tpu.memory_space<any>>
    %6 = tpu.memref_slice %arg2[%c0_i32_4] : memref<1x!tpu.dma_semaphore, #tpu.memory_space<semaphore_mem>> -> memref<1x!tpu.dma_semaphore, #tpu.memory_space<semaphore_mem>>
    %7 = tpu.memref_squeeze %6 : memref<1x!tpu.dma_semaphore, #tpu.memory_space<semaphore_mem>> -> memref<!tpu.dma_semaphore, #tpu.memory_space<semaphore_mem>>
    tpu.wait_dma2 semaphore(%7 : memref<!tpu.dma_semaphore, #tpu.memory_space<semaphore_mem>>) src(%4 : memref<2x1024xf32, #tpu.memory_space<any>>) dst(%5 : memref<2x1024xf32, #tpu.memory_space<any>>)
    return
  }
}

</mosaic_0001>

<llo_original>
// kernel: tpu_custom_call.1
$region0: #{tpu_custom_call.1}
  #allocation0 [shape = 'u32[]', space=smem, size = 0x4, offset = 0x4, fixed_abs, tag = 'smem constant byte address 0x4 - core index']
  #allocation1 [shape = 'u32[144,128]{1,0:T(1,128)}', space=vmem, size = 0x12000, scoped, tag = 'internal scratch']
  #allocation2 [shape = 's32[1]{0}', space=sflag, size = 0x4, scoped, tag = 'scratch operand']
  #allocation3 [shape = 's32[]', space=sflag, size = 0x4, offset = 0, fixed_abs, tag = 'sflag constant byte address 0x0 - dummy sync flag']
  #allocation4 [shape = 'u32[0]{0}', space=smem, size = 0, offset = 0, fixed_abs, tag = 'smem constant byte address 0x0 - null']
  %s0 = inlined_call_operand.hbm [shape: f32[2,1024], index: 0, kind: input, shape index: {}]
  %s1 = inlined_call_operand.hbm [shape: f32[2,1024], index: 1, kind: output, shape index: {}]
  %s2 = sld [smem:[#allocation0]]
  $region2: #{tpu_custom_call.1} parent=0
    _
  %s4 = ssub.s32 1, %s2
  %s5 = scalar_select 0, %s4, %s2
  %s7 = sshll.u32 1, 14
  %s8 = sxor.u32 4294967295, %s7
  %12 = dma.general %s0, 256, %s1, [#allocation2], 131072, [#allocation4], 0, 0
  %s13 = smul.u32 2, 1
  %s14 = smul.u32 %s13, 8
  %s15 = sshll.u32 %s14, 4
  %16 = dma.done [#allocation2], %s15
  %17 = vsyncmov [#allocation2]
  %s18 = vpop.sfrf %17
  %p19 = scmp.eq.s32.totalorder %s18, 0
  %p20 = pneg %p19
  %22 = shalt.err (%p20)

</llo_original>
